<compile_context>
chip_gen: v5e
topology: v5e:2x2
jax: 0.10.0
libtpu: 0.0.40
codegen_flags: <defaults>
</compile_context>

<pallas_src>
import jax
import jax.numpy as jnp
from jax.experimental import pallas as pl
from jax.experimental.pallas import tpu as pltpu


def rescale_kernel(w_ref, x_ref, o_ref):
    # w_ref: (R, 1) f32 per-row scales; x_ref / o_ref: (R, T) tiles.
    w = w_ref[...]                                        # (R, 1) lane-broadcast
    o_ref[...] = (x_ref[...].astype(jnp.float32) * w).astype(o_ref.dtype)


def _row_align(dtype):
    # Sublane packing: f32 -> 8, bf16/f16 -> 16, int8/fp8 -> 32.
    return {1: 32, 2: 16, 4: 8}.get(jnp.dtype(dtype).itemsize, 8)


def rescale(x, weight):
    """x: (N, C, H, W); weight: (C, 1, 1) (PyTorch parameter shape)."""
    N, C, H, W = x.shape
    NC, HW = N * C, H * W

    # Free 2-D view of the contiguous NCHW data, plus a per-row weight column
    # (row r = (n, c) -> weight[c]); keep the weight in f32 for precision.
    x2 = x.reshape(NC, HW)
    w_rows = jnp.broadcast_to(
        jnp.asarray(weight, jnp.float32).reshape(1, C), (N, C)
    ).reshape(NC, 1)

    LANE = 128
    itemsize = jnp.dtype(x.dtype).itemsize
    sub = _row_align(x.dtype)

    # Last-dim tile: lane-dense. Use the full dim when it is small or not a
    # multiple of 128 (full-dim exemption), else a large multiple of 128.
    max_t = 4096
    T = HW if (HW <= max_t or HW % LANE != 0) else max_t

    # Row tile: multiple of the sublane packing, sized so one input block is
    # ~2 MiB; 2x(in + out) double buffers then fit every generation's scoped
    # VMEM budget with headroom.
    target_block_bytes = 2 * 1024 * 1024
    target_rows = max(sub, (target_block_bytes // (itemsize * T)) // sub * sub)
    R = NC if NC <= target_rows else target_rows

    grid = (pl.cdiv(NC, R), pl.cdiv(HW, T))

    out2 = pl.pallas_call(
        rescale_kernel,
        out_shape=jax.ShapeDtypeStruct((NC, HW), x.dtype),
        grid=grid,
        in_specs=[
            pl.BlockSpec((R, 1), lambda i, j: (i, 0)),   # per-row weight column
            pl.BlockSpec((R, T), lambda i, j: (i, j)),   # x tile
        ],
        out_specs=pl.BlockSpec((R, T), lambda i, j: (i, j)),
        compiler_params=pltpu.CompilerParams(
            dimension_semantics=("parallel", "parallel"),
            vmem_limit_bytes=32 * 1024 * 1024,
        ),
    )(w_rows, x2)

    return out2.reshape(N, C, H, W)


if __name__ == "__main__":
    key = jax.random.PRNGKey(0)
    N, C, H, W = 2, 4, 16, 16
    x = jax.random.normal(key, (N, C, H, W), dtype=jnp.float32)

    # PyTorch __init__ sets weight = ones(C, 1, 1). Perturb deterministically
    # so the per-channel broadcast is actually exercised.
    weight = (jnp.ones((C, 1, 1), dtype=jnp.float32)
              + 0.1 * jnp.arange(C, dtype=jnp.float32).reshape(C, 1, 1))

    out = jax.block_until_ready(rescale(x, weight))

    # Reference semantics of the PyTorch forward: weight (C,1,1) * x (N,C,H,W)
    ref = weight.reshape(1, C, 1, 1) * x
    assert out.shape == x.shape and out.dtype == x.dtype
    assert jnp.allclose(out, ref, atol=1e-6, rtol=1e-6)
    print("KERNEL_OK")
</pallas_src>

<mosaic_0001>
module attributes {stable_mosaic.version = 11 : i64} {
  func.func @rescale_kernel(%arg0: i32, %arg1: i32, %arg2: memref<8x1xf32, #tpu.memory_space<vmem>>, %arg3: memref<8x256xf32, #tpu.memory_space<vmem>>, %arg4: memref<8x256xf32, #tpu.memory_space<vmem>>) attributes {dimension_semantics = [#tpu.dimension_semantics<parallel>, #tpu.dimension_semantics<parallel>], iteration_bounds = array<i64: 1, 1>, scalar_prefetch = 0 : i64, scratch_operands = 0 : i64, tpu.core_type = #tpu.core_type<tc>, window_params = [{transform_indices = @transform_0, window_bounds = array<i64: 8, 1>}, {transform_indices = @transform_1, window_bounds = array<i64: 8, 256>}, {transform_indices = @transform_2, window_bounds = array<i64: 8, 256>}]} {
    %c0 = arith.constant 0 : index
    %c0_0 = arith.constant 0 : index
    %0 = vector.load %arg2[%c0, %c0_0] : memref<8x1xf32, #tpu.memory_space<vmem>>, vector<8x1xf32>
    %c0_1 = arith.constant 0 : index
    %c0_2 = arith.constant 0 : index
    %1 = vector.load %arg3[%c0_1, %c0_2] : memref<8x256xf32, #tpu.memory_space<vmem>>, vector<8x256xf32>
    %2 = vector.broadcast %0 : vector<8x1xf32> to vector<8x256xf32>
    %3 = arith.mulf %1, %2 : vector<8x256xf32>
    %c0_3 = arith.constant 0 : index
    %c0_4 = arith.constant 0 : index
    %4 = vector.load %arg4[%c0_3, %c0_4] : memref<8x256xf32, #tpu.memory_space<vmem>>, vector<8x256xf32>
    tpu.vector_store %arg4[%c0_3, %c0_4], %3 {strides = array<i32>} : memref<8x256xf32, #tpu.memory_space<vmem>>, vector<8x256xf32>,
    return
  }
  func.func @transform_0(%arg0: i32, %arg1: i32) -> (i32, i32) {
    %c0_i32 = arith.constant 0 : i32
    %c0_i32_0 = arith.constant 0 : i32
    return %arg0, %c0_i32 : i32, i32
  }
  func.func @transform_1(%arg0: i32, %arg1: i32) -> (i32, i32) {
    %c0_i32 = arith.constant 0 : i32
    return %arg0, %arg1 : i32, i32
  }
  func.func @transform_2(%arg0: i32, %arg1: i32) -> (i32, i32) {
    %c0_i32 = arith.constant 0 : i32
    return %arg0, %arg1 : i32, i32
  }
}

</mosaic_0001>

<llo_original>
// kernel: tpu_custom_call.1
$region0: #{tpu_custom_call.1}
  #allocation0 [shape = 'u32[]', space=smem, size = 0x4, offset = 0x4, fixed_abs, tag = 'smem constant byte address 0x4 - core index']
  #allocation1 [shape = 'u32[72,128]{1,0:T(1,128)}', space=vmem, size = 0x9000, scoped, tag = 'internal scratch']
  %s0 = inlined_call_operand.vmem [shape: f32[8,1], index: 0, kind: input, shape index: {}]
  %s1 = inlined_call_operand.hbm [shape: f32[8,256], index: 1, kind: input, shape index: {}]
  %s2 = inlined_call_operand.hbm [shape: f32[8,256], index: 2, kind: output, shape index: {}]
  %s3 = sld [smem:[#allocation0]]
  $region22: #{tpu_custom_call.1} parent=0
    _
  %s5 = ssub.s32 1, %s3
  %s6 = scalar_select 0, %s5, %s3
  $region1: #{tpu_custom_call.1} parent=0
    #allocation2 [shape = 'u8[8192]{0}', space=vmem, size = 0x2000, scoped, tag = 'input window, operand 1, single buffered']
    #allocation3 [shape = 's32[1]{0}', space=sflag, size = 0x4, scoped, tag = 'scoped memory for tpu_custom_call.1']
    #allocation4 [shape = 's32[1]{0}', space=sflag, size = 0x4, scoped, tag = 'scoped memory for tpu_custom_call.1']
    #allocation5 [shape = 'u8[8192]{0}', space=vmem, size = 0x2000, scoped, tag = 'output window, operand 0, single buffered']
    %7 = vsyncpa [#allocation3], 0
    %8 = vsyncpa [#allocation4], 0
    // Predicated region
    $region2: #{tpu_custom_call.1} parent=1 // pred_check
      _
    $region3: #{tpu_custom_call.1} parent=1 // pred_check_branch
      %10 = sbr.rel (0) target = $region5
    $region4: #{tpu_custom_call.1} parent=1 // pred_region
      _
    $region5: #{tpu_custom_call.1} parent=1 // pred_fallthru
      _
    // Predicated region
    $region6: #{tpu_custom_call.1} parent=1 // pred_check
      _
    $region7: #{tpu_custom_call.1} parent=1 // pred_check_branch
      %12 = sbr.rel (0) target = $region9
    $region8: #{tpu_custom_call.1} parent=1 // pred_region
      %14 = vsyncadd [#allocation3], 0
      %s16 = sshll.u32 %s1, 4
      %s17 = int_to_ptr.hbm [resolvable:$true] %s16
      %s18 = sshll.u32 [#allocation2], 4
      %s19 = int_to_ptr.vmem [resolvable:$true] %s18
      %21 = dma.hbm_to_vmem [thread:$0]  %s17, 256, %s19, [#allocation3]
    $region9: #{tpu_custom_call.1} parent=1 // pred_fallthru
      _
    // Predicated region
    $region10: #{tpu_custom_call.1} parent=1 // pred_check
      _
    $region11: #{tpu_custom_call.1} parent=1 // pred_check_branch
      %23 = sbr.rel (0) target = $region13
    $region12: #{tpu_custom_call.1} parent=1 // pred_region
      %25 = dma.done [#allocation3], 256
    $region13: #{tpu_custom_call.1} parent=1 // pred_fallthru
      _
    %v26 = vld [vmem:[%s0] sm:$0xff]
    %v27 = vld [vmem:[#allocation2] sm:$0xff]
    %v28 = vld [vmem:[#allocation2 + $0x8] sm:$0xff]
    %30 = vset.pattern.permute.xlu0 0
    %31 = vperm.xlu0 %30, %v26
    %v32 = vpop.permute.xlu0 %31
    %v34 = vmul.f32 %v27, %v32
    %v35 = vmul.f32 %v28, %v32
    %36 = vst [vmem:[#allocation5] sm:$0xff] %v34
    %37 = vst [vmem:[#allocation5 + $0x8] sm:$0xff] %v35
    // Predicated region
    $region14: #{tpu_custom_call.1} parent=1 // pred_check
      _
    $region15: #{tpu_custom_call.1} parent=1 // pred_check_branch
      %39 = sbr.rel (0) target = $region17
    $region16: #{tpu_custom_call.1} parent=1 // pred_region
      %41 = vsyncadd [#allocation4], 0
      %s43 = sshll.u32 [#allocation5], 4
      %s44 = int_to_ptr.vmem [resolvable:$true] %s43
      %s45 = sshll.u32 %s2, 4
      %s46 = int_to_ptr.hbm [resolvable:$true] %s45
      %48 = dma.vmem_to_hbm [thread:$0]  %s44, 256, %s46, [#allocation4]
    $region17: #{tpu_custom_call.1} parent=1 // pred_fallthru
      _
    // Predicated region
    $region18: #{tpu_custom_call.1} parent=1 // pred_check
      _
    $region19: #{tpu_custom_call.1} parent=1 // pred_check_branch
      %50 = sbr.rel (0) target = $region21
    $region20: #{tpu_custom_call.1} parent=1 // pred_region
      %52 = dma.done [#allocation4], 256
    $region21: #{tpu_custom_call.1} parent=1 // pred_fallthru
      _
    %53 = vsyncpa [#allocation3], 1
    %54 = vsyncpa [#allocation4], 1

</llo_original>
